<compile_context>
chip_gen: v5e
topology: v5e:2x2
jax: 0.10.0
libtpu: 0.0.40
codegen_flags: <defaults>
</compile_context>

<pallas_src>
import jax
import jax.numpy as jnp
from jax.experimental import pallas as pl
from jax.experimental.pallas import tpu as pltpu

LANES = 128


def strain_grad_kernel(w_ref, ab_ref, g0_ref, e_ref, out_ref):
    """d(psi)/dE_voigt - g0 for one (TR, 128) tile of each Voigt component.

    w_ref:  (3, 3) f32 SMEM  -- ConvexNN.W
    ab_ref: (3,)   f32 SMEM  -- ConvexNN.a_b
    g0_ref: (3,)   f32 SMEM  -- d(psi)/dE at E = 0 (precomputed scalars)
    e_ref:  (3, TR, 128) f32 VMEM -- strain components e0, e1, e2 (dense planes)
    out_ref:(3, TR, 128) f32 VMEM
    """
    e0 = e_ref[0]          # (TR, 128)
    e1 = e_ref[1]
    e2 = e_ref[2]

    # C = [[a, c, 0], [c, b, 0], [0, 0, 1]]
    a = 1.0 + 2.0 * e0
    b = 1.0 + 2.0 * e1
    c = e2

    I1 = a + b + 1.0
    I3 = a * b - c * c
    I2 = I3 + a + b

    # 3 exact reciprocals per element (instead of 9 divides in the j,k loop).
    r1 = 1.0 / I1
    r2 = 1.0 / I2
    r3 = 1.0 / I3

    log1 = jnp.log(I1)
    log2 = jnp.log(I2)
    log3 = jnp.log(I3)

    # dI_k / de_m  (dI1/de0 = dI1/de1 = 2, dI1/de2 = 0 -> skipped;
    #               dI2/de2 == dI3/de2 == -2c)
    d2_e0 = 2.0 * (b + 1.0)
    d2_e1 = 2.0 * (a + 1.0)
    d3_e0 = 2.0 * b
    d3_e1 = 2.0 * a
    dc = -2.0 * c

    acc0 = acc1 = acc2 = None
    for j in range(3):  # static unroll, 3 terms
        exp_j = jnp.exp(
            w_ref[j, 0] * log1 + w_ref[j, 1] * log2 + w_ref[j, 2] * log3
        )
        s1 = (ab_ref[j] * w_ref[j, 0]) * exp_j * r1
        s2 = (ab_ref[j] * w_ref[j, 1]) * exp_j * r2
        s3 = (ab_ref[j] * w_ref[j, 2]) * exp_j * r3
        t0 = 2.0 * s1 + d2_e0 * s2 + d3_e0 * s3
        t1 = 2.0 * s1 + d2_e1 * s2 + d3_e1 * s3
        t2 = dc * (s2 + s3)
        acc0 = t0 if acc0 is None else acc0 + t0
        acc1 = t1 if acc1 is None else acc1 + t1
        acc2 = t2 if acc2 is None else acc2 + t2

    out_ref[0] = 0.5 * acc0 - g0_ref[0]
    out_ref[1] = 0.5 * acc1 - g0_ref[1]
    out_ref[2] = 0.5 * acc2 - g0_ref[2]


def _grad_psi_at_zero(W, a_b):
    """d(psi)/dE_voigt at E = 0: invariants are constants (I1=I2=3, I3=1)."""
    I0 = jnp.array([3.0, 3.0, 1.0], dtype=jnp.float32)
    # dI0[k, m] = dI_{k+1}/de_m at E = 0 (a = b = 1, c = 0)
    dI0 = jnp.array(
        [[2.0, 2.0, 0.0],
         [4.0, 4.0, 0.0],
         [2.0, 2.0, 0.0]],
        dtype=jnp.float32,
    )
    exp_j = jnp.exp(W @ jnp.log(I0))                   # (3,)
    coef = a_b * exp_j                                 # (3,)
    return 0.5 * (coef @ ((W / I0[None, :]) @ dI0))    # (3,)


def strain_energy_forward(E_voigt, W, a_b, d_e=None, row_tile=256):
    """Pallas implementation of StrainEnergyPotential.forward.

    E_voigt: (B, T, 3) float32 (small strains -> positive invariants, as in torch)
    returns: (B, T, 3) float32
    """
    del d_e  # additive constant inside psi: zero contribution to the gradient.
    B, T, V = E_voigt.shape
    assert V == 3
    N = B * T

    R = -(-N // LANES)                     # rows of 128 lanes needed
    if R <= row_tile:
        TR = -(-R // 8) * 8                # single block, rows padded to mult of 8
    else:
        TR = row_tile                      # ~256*128*4B = 128 KB per component tile
    R_pad = -(-R // TR) * TR
    Npad = R_pad * LANES

    # (B,T,3) -> (3, R_pad, 128). Padded lanes hold zero strain -> I1=I2=3, I3=1
    # (finite logs / reciprocals); their outputs are discarded below.
    e = jnp.transpose(E_voigt.reshape(N, 3))           # (3, N)
    e = jnp.pad(e, ((0, 0), (0, Npad - N)))
    e = e.reshape(3, R_pad, LANES)

    g0 = _grad_psi_at_zero(W, a_b)                     # (3,) scalars

    out = pl.pallas_call(
        strain_grad_kernel,
        out_shape=jax.ShapeDtypeStruct((3, R_pad, LANES), jnp.float32),
        grid=(R_pad // TR,),
        in_specs=[
            pl.BlockSpec(memory_space=pltpu.SMEM),              # W (3,3)
            pl.BlockSpec(memory_space=pltpu.SMEM),              # a_b (3,)
            pl.BlockSpec(memory_space=pltpu.SMEM),              # g0 (3,)
            pl.BlockSpec((3, TR, LANES), lambda i: (0, i, 0)),  # strain planes
        ],
        out_specs=pl.BlockSpec((3, TR, LANES), lambda i: (0, i, 0)),
        compiler_params=pltpu.CompilerParams(
            dimension_semantics=("parallel",),
        ),
    )(W, a_b, g0, e)

    out = out.reshape(3, Npad)[:, :N]
    return jnp.transpose(out).reshape(B, T, 3)


# ---------------- pure-JAX reference (mirrors the torch autograd path) --------
def _psi_ref_single(ev, W, a_b, d_e):
    e0, e1, e2 = ev[0], ev[1], ev[2]
    C = jnp.array(
        [[1.0 + 2.0 * e0, e2, 0.0],
         [e2, 1.0 + 2.0 * e1, 0.0],
         [0.0, 0.0, 1.0]]
    )
    I1 = jnp.trace(C)
    I2 = 0.5 * (I1 ** 2 - jnp.trace(C @ C))
    I3 = jnp.linalg.det(C)
    Ivec = jnp.stack([I1, I2, I3])
    exp_inputs = jnp.exp(jnp.log(Ivec) @ W.T)
    return 0.5 * jnp.sum(a_b * (exp_inputs + d_e))


def reference_forward(E_voigt, W, a_b, d_e):
    B, T, _ = E_voigt.shape
    flat = E_voigt.reshape(B * T, 3)
    g_fn = jax.vmap(jax.grad(lambda ev: _psi_ref_single(ev, W, a_b, d_e)))
    g = g_fn(flat)
    g0 = jax.grad(lambda ev: _psi_ref_single(ev, W, a_b, d_e))(
        jnp.zeros((3,), jnp.float32))
    return (g - g0[None, :]).reshape(B, T, 3)


if __name__ == "__main__":
    # Deterministic parameter init, exactly as in ConvexNN.__init__
    W = jnp.array(
        [[1.0, 0.0, -2.0 / 3.0],
         [0.0, 1.0, -4.0 / 3.0],
         [0.0, 0.0, 1.0]],
        dtype=jnp.float32,
    )
    a_b = jnp.array([1.0, 1.0, 1.0], dtype=jnp.float32)
    d_e = jnp.array([-3.0, -3.0, 0.0], dtype=jnp.float32)
    # TODO(synk): ConvexNN.bias_exp is declared but never used in the torch forward.

    key = jax.random.PRNGKey(0)

    # --- small test (single block) ---
    B, T = 2, 8
    # Small strains -> positive invariants (torch.log would NaN otherwise too).
    E_voigt = 0.05 * jax.random.normal(key, (B, T, 3), dtype=jnp.float32)

    out = strain_energy_forward(E_voigt, W, a_b, d_e)
    out = jax.block_until_ready(out)

    ref = reference_forward(E_voigt, W, a_b, d_e)
    assert out.shape == (B, T, 3)
    assert not bool(jnp.allclose(out, jnp.zeros_like(out))), "Gradients are zero!"
    assert bool(jnp.allclose(out, ref, atol=1e-5, rtol=1e-5)), "mismatch vs reference"

    # --- exercise the multi-block (grid > 1) path with a small row_tile ---
    B2, T2 = 4, 512
    E2 = 0.05 * jax.random.normal(jax.random.PRNGKey(1), (B2, T2, 3), jnp.float32)
    out2 = jax.block_until_ready(strain_energy_forward(E2, W, a_b, d_e, row_tile=8))
    ref2 = reference_forward(E2, W, a_b, d_e)
    assert bool(jnp.allclose(out2, ref2, atol=1e-5, rtol=1e-5)), "mismatch (tiled)"

    print("KERNEL_OK")
</pallas_src>

<mosaic_0001>
module attributes {stable_mosaic.version = 11 : i64} {
  func.func @strain_grad_kernel(%arg0: i32, %arg1: memref<3x3xf32, #tpu.memory_space<smem>>, %arg2: memref<3xf32, #tpu.memory_space<smem>>, %arg3: memref<3xf32, #tpu.memory_space<smem>>, %arg4: memref<3x8x128xf32, #tpu.memory_space<vmem>>, %arg5: memref<3x8x128xf32, #tpu.memory_space<vmem>>) attributes {dimension_semantics = [#tpu.dimension_semantics<parallel>], iteration_bounds = array<i64: 1>, scalar_prefetch = 0 : i64, scratch_operands = 0 : i64, tpu.core_type = #tpu.core_type<tc>, window_params = [{transform_indices = @transform_0, window_bounds = array<i64: 3, 3>}, {transform_indices = @transform_1, window_bounds = array<i64: 3>}, {transform_indices = @transform_2, window_bounds = array<i64: 3>}, {transform_indices = @transform_3, window_bounds = array<i64: 3, 8, 128>}, {transform_indices = @transform_4, window_bounds = array<i64: 3, 8, 128>}]} {
    %c0 = arith.constant 0 : index
    %c0_0 = arith.constant 0 : index
    %c0_1 = arith.constant 0 : index
    %0 = vector.load %arg4[%c0, %c0_0, %c0_1] : memref<3x8x128xf32, #tpu.memory_space<vmem>>, vector<1x8x128xf32>
    %1 = vector.shape_cast %0 : vector<1x8x128xf32> to vector<8x128xf32>
    %c1 = arith.constant 1 : index
    %c0_2 = arith.constant 0 : index
    %c0_3 = arith.constant 0 : index
    %2 = vector.load %arg4[%c1, %c0_2, %c0_3] : memref<3x8x128xf32, #tpu.memory_space<vmem>>, vector<1x8x128xf32>
    %3 = vector.shape_cast %2 : vector<1x8x128xf32> to vector<8x128xf32>
    %c2 = arith.constant 2 : index
    %c0_4 = arith.constant 0 : index
    %c0_5 = arith.constant 0 : index
    %4 = vector.load %arg4[%c2, %c0_4, %c0_5] : memref<3x8x128xf32, #tpu.memory_space<vmem>>, vector<1x8x128xf32>
    %5 = vector.shape_cast %4 : vector<1x8x128xf32> to vector<8x128xf32>
    %cst = arith.constant 2.000000e+00 : f32
    %6 = vector.broadcast %cst : f32 to vector<8x128xf32>
    %7 = arith.mulf %6, %1 : vector<8x128xf32>
    %cst_6 = arith.constant 1.000000e+00 : f32
    %8 = vector.broadcast %cst_6 : f32 to vector<8x128xf32>
    %9 = arith.addf %8, %7 : vector<8x128xf32>
    %cst_7 = arith.constant 2.000000e+00 : f32
    %10 = vector.broadcast %cst_7 : f32 to vector<8x128xf32>
    %11 = arith.mulf %10, %3 : vector<8x128xf32>
    %cst_8 = arith.constant 1.000000e+00 : f32
    %12 = vector.broadcast %cst_8 : f32 to vector<8x128xf32>
    %13 = arith.addf %12, %11 : vector<8x128xf32>
    %14 = arith.addf %9, %13 : vector<8x128xf32>
    %cst_9 = arith.constant 1.000000e+00 : f32
    %15 = vector.broadcast %cst_9 : f32 to vector<8x128xf32>
    %16 = arith.addf %14, %15 : vector<8x128xf32>
    %17 = arith.mulf %9, %13 : vector<8x128xf32>
    %18 = arith.mulf %5, %5 : vector<8x128xf32>
    %19 = arith.subf %17, %18 : vector<8x128xf32>
    %20 = arith.addf %19, %9 : vector<8x128xf32>
    %21 = arith.addf %20, %13 : vector<8x128xf32>
    %cst_10 = arith.constant 1.000000e+00 : f32
    %22 = vector.broadcast %cst_10 : f32 to vector<8x128xf32>
    %23 = arith.divf %22, %16 : vector<8x128xf32>
    %cst_11 = arith.constant 1.000000e+00 : f32
    %24 = vector.broadcast %cst_11 : f32 to vector<8x128xf32>
    %25 = arith.divf %24, %21 : vector<8x128xf32>
    %cst_12 = arith.constant 1.000000e+00 : f32
    %26 = vector.broadcast %cst_12 : f32 to vector<8x128xf32>
    %27 = arith.divf %26, %19 : vector<8x128xf32>
    %28 = math.log %16 : vector<8x128xf32>
    %29 = math.log %21 : vector<8x128xf32>
    %30 = math.log %19 : vector<8x128xf32>
    %cst_13 = arith.constant 1.000000e+00 : f32
    %31 = vector.broadcast %cst_13 : f32 to vector<8x128xf32>
    %32 = arith.addf %13, %31 : vector<8x128xf32>
    %cst_14 = arith.constant 2.000000e+00 : f32
    %33 = vector.broadcast %cst_14 : f32 to vector<8x128xf32>
    %34 = arith.mulf %33, %32 : vector<8x128xf32>
    %cst_15 = arith.constant 1.000000e+00 : f32
    %35 = vector.broadcast %cst_15 : f32 to vector<8x128xf32>
    %36 = arith.addf %9, %35 : vector<8x128xf32>
    %cst_16 = arith.constant 2.000000e+00 : f32
    %37 = vector.broadcast %cst_16 : f32 to vector<8x128xf32>
    %38 = arith.mulf %37, %36 : vector<8x128xf32>
    %cst_17 = arith.constant 2.000000e+00 : f32
    %39 = vector.broadcast %cst_17 : f32 to vector<8x128xf32>
    %40 = arith.mulf %39, %13 : vector<8x128xf32>
    %cst_18 = arith.constant 2.000000e+00 : f32
    %41 = vector.broadcast %cst_18 : f32 to vector<8x128xf32>
    %42 = arith.mulf %41, %9 : vector<8x128xf32>
    %cst_19 = arith.constant -2.000000e+00 : f32
    %43 = vector.broadcast %cst_19 : f32 to vector<8x128xf32>
    %44 = arith.mulf %43, %5 : vector<8x128xf32>
    %c0_20 = arith.constant 0 : index
    %c0_21 = arith.constant 0 : index
    %45 = memref.load %arg1[%c0_20, %c0_21] : memref<3x3xf32, #tpu.memory_space<smem>>
    %46 = vector.broadcast %45 : f32 to vector<8x128xf32>
    %47 = arith.mulf %46, %28 : vector<8x128xf32>
    %c0_22 = arith.constant 0 : index
    %c1_23 = arith.constant 1 : index
    %48 = memref.load %arg1[%c0_22, %c1_23] : memref<3x3xf32, #tpu.memory_space<smem>>
    %49 = vector.broadcast %48 : f32 to vector<8x128xf32>
    %50 = arith.mulf %49, %29 : vector<8x128xf32>
    %51 = arith.addf %47, %50 : vector<8x128xf32>
    %c0_24 = arith.constant 0 : index
    %c2_25 = arith.constant 2 : index
    %52 = memref.load %arg1[%c0_24, %c2_25] : memref<3x3xf32, #tpu.memory_space<smem>>
    %53 = vector.broadcast %52 : f32 to vector<8x128xf32>
    %54 = arith.mulf %53, %30 : vector<8x128xf32>
    %55 = arith.addf %51, %54 : vector<8x128xf32>
    %56 = math.exp %55 : vector<8x128xf32>
    %c0_26 = arith.constant 0 : index
    %57 = memref.load %arg2[%c0_26] : memref<3xf32, #tpu.memory_space<smem>>
    %c0_27 = arith.constant 0 : index
    %c0_28 = arith.constant 0 : index
    %58 = memref.load %arg1[%c0_27, %c0_28] : memref<3x3xf32, #tpu.memory_space<smem>>
    %59 = arith.mulf %57, %58 : f32
    %60 = vector.broadcast %59 : f32 to vector<8x128xf32>
    %61 = arith.mulf %60, %56 : vector<8x128xf32>
    %62 = arith.mulf %61, %23 : vector<8x128xf32>
    %c0_29 = arith.constant 0 : index
    %63 = memref.load %arg2[%c0_29] : memref<3xf32, #tpu.memory_space<smem>>
    %c0_30 = arith.constant 0 : index
    %c1_31 = arith.constant 1 : index
    %64 = memref.load %arg1[%c0_30, %c1_31] : memref<3x3xf32, #tpu.memory_space<smem>>
    %65 = arith.mulf %63, %64 : f32
    %66 = vector.broadcast %65 : f32 to vector<8x128xf32>
    %67 = arith.mulf %66, %56 : vector<8x128xf32>
    %68 = arith.mulf %67, %25 : vector<8x128xf32>
    %c0_32 = arith.constant 0 : index
    %69 = memref.load %arg2[%c0_32] : memref<3xf32, #tpu.memory_space<smem>>
    %c0_33 = arith.constant 0 : index
    %c2_34 = arith.constant 2 : index
    %70 = memref.load %arg1[%c0_33, %c2_34] : memref<3x3xf32, #tpu.memory_space<smem>>
    %71 = arith.mulf %69, %70 : f32
    %72 = vector.broadcast %71 : f32 to vector<8x128xf32>
    %73 = arith.mulf %72, %56 : vector<8x128xf32>
    %74 = arith.mulf %73, %27 : vector<8x128xf32>
    %cst_35 = arith.constant 2.000000e+00 : f32
    %75 = vector.broadcast %cst_35 : f32 to vector<8x128xf32>
    %76 = arith.mulf %75, %62 : vector<8x128xf32>
    %77 = arith.mulf %34, %68 : vector<8x128xf32>
    %78 = arith.addf %76, %77 : vector<8x128xf32>
    %79 = arith.mulf %40, %74 : vector<8x128xf32>
    %80 = arith.addf %78, %79 : vector<8x128xf32>
    %cst_36 = arith.constant 2.000000e+00 : f32
    %81 = vector.broadcast %cst_36 : f32 to vector<8x128xf32>
    %82 = arith.mulf %81, %62 : vector<8x128xf32>
    %83 = arith.mulf %38, %68 : vector<8x128xf32>
    %84 = arith.addf %82, %83 : vector<8x128xf32>
    %85 = arith.mulf %42, %74 : vector<8x128xf32>
    %86 = arith.addf %84, %85 : vector<8x128xf32>
    %87 = arith.addf %68, %74 : vector<8x128xf32>
    %88 = arith.mulf %44, %87 : vector<8x128xf32>
    %c1_37 = arith.constant 1 : index
    %c0_38 = arith.constant 0 : index
    %89 = memref.load %arg1[%c1_37, %c0_38] : memref<3x3xf32, #tpu.memory_space<smem>>
    %90 = vector.broadcast %89 : f32 to vector<8x128xf32>
    %91 = arith.mulf %90, %28 : vector<8x128xf32>
    %c1_39 = arith.constant 1 : index
    %c1_40 = arith.constant 1 : index
    %92 = memref.load %arg1[%c1_39, %c1_40] : memref<3x3xf32, #tpu.memory_space<smem>>
    %93 = vector.broadcast %92 : f32 to vector<8x128xf32>
    %94 = arith.mulf %93, %29 : vector<8x128xf32>
    %95 = arith.addf %91, %94 : vector<8x128xf32>
    %c1_41 = arith.constant 1 : index
    %c2_42 = arith.constant 2 : index
    %96 = memref.load %arg1[%c1_41, %c2_42] : memref<3x3xf32, #tpu.memory_space<smem>>
    %97 = vector.broadcast %96 : f32 to vector<8x128xf32>
    %98 = arith.mulf %97, %30 : vector<8x128xf32>
    %99 = arith.addf %95, %98 : vector<8x128xf32>
    %100 = math.exp %99 : vector<8x128xf32>
    %c1_43 = arith.constant 1 : index
    %101 = memref.load %arg2[%c1_43] : memref<3xf32, #tpu.memory_space<smem>>
    %c1_44 = arith.constant 1 : index
    %c0_45 = arith.constant 0 : index
    %102 = memref.load %arg1[%c1_44, %c0_45] : memref<3x3xf32, #tpu.memory_space<smem>>
    %103 = arith.mulf %101, %102 : f32
    %104 = vector.broadcast %103 : f32 to vector<8x128xf32>
    %105 = arith.mulf %104, %100 : vector<8x128xf32>
    %106 = arith.mulf %105, %23 : vector<8x128xf32>
    %c1_46 = arith.constant 1 : index
    %107 = memref.load %arg2[%c1_46] : memref<3xf32, #tpu.memory_space<smem>>
    %c1_47 = arith.constant 1 : index
    %c1_48 = arith.constant 1 : index
    %108 = memref.load %arg1[%c1_47, %c1_48] : memref<3x3xf32, #tpu.memory_space<smem>>
    %109 = arith.mulf %107, %108 : f32
    %110 = vector.broadcast %109 : f32 to vector<8x128xf32>
    %111 = arith.mulf %110, %100 : vector<8x128xf32>
    %112 = arith.mulf %111, %25 : vector<8x128xf32>
    %c1_49 = arith.constant 1 : index
    %113 = memref.load %arg2[%c1_49] : memref<3xf32, #tpu.memory_space<smem>>
    %c1_50 = arith.constant 1 : index
    %c2_51 = arith.constant 2 : index
    %114 = memref.load %arg1[%c1_50, %c2_51] : memref<3x3xf32, #tpu.memory_space<smem>>
    %115 = arith.mulf %113, %114 : f32
    %116 = vector.broadcast %115 : f32 to vector<8x128xf32>
    %117 = arith.mulf %116, %100 : vector<8x128xf32>
    %118 = arith.mulf %117, %27 : vector<8x128xf32>
    %cst_52 = arith.constant 2.000000e+00 : f32
    %119 = vector.broadcast %cst_52 : f32 to vector<8x128xf32>
    %120 = arith.mulf %119, %106 : vector<8x128xf32>
    %121 = arith.mulf %34, %112 : vector<8x128xf32>
    %122 = arith.addf %120, %121 : vector<8x128xf32>
    %123 = arith.mulf %40, %118 : vector<8x128xf32>
    %124 = arith.addf %122, %123 : vector<8x128xf32>
    %cst_53 = arith.constant 2.000000e+00 : f32
    %125 = vector.broadcast %cst_53 : f32 to vector<8x128xf32>
    %126 = arith.mulf %125, %106 : vector<8x128xf32>
    %127 = arith.mulf %38, %112 : vector<8x128xf32>
    %128 = arith.addf %126, %127 : vector<8x128xf32>
    %129 = arith.mulf %42, %118 : vector<8x128xf32>
    %130 = arith.addf %128, %129 : vector<8x128xf32>
    %131 = arith.addf %112, %118 : vector<8x128xf32>
    %132 = arith.mulf %44, %131 : vector<8x128xf32>
    %133 = arith.addf %80, %124 : vector<8x128xf32>
    %134 = arith.addf %86, %130 : vector<8x128xf32>
    %135 = arith.addf %88, %132 : vector<8x128xf32>
    %c2_54 = arith.constant 2 : index
    %c0_55 = arith.constant 0 : index
    %136 = memref.load %arg1[%c2_54, %c0_55] : memref<3x3xf32, #tpu.memory_space<smem>>
    %137 = vector.broadcast %136 : f32 to vector<8x128xf32>
    %138 = arith.mulf %137, %28 : vector<8x128xf32>
    %c2_56 = arith.constant 2 : index
    %c1_57 = arith.constant 1 : index
    %139 = memref.load %arg1[%c2_56, %c1_57] : memref<3x3xf32, #tpu.memory_space<smem>>
    %140 = vector.broadcast %139 : f32 to vector<8x128xf32>
    %141 = arith.mulf %140, %29 : vector<8x128xf32>
    %142 = arith.addf %138, %141 : vector<8x128xf32>
    %c2_58 = arith.constant 2 : index
    %c2_59 = arith.constant 2 : index
    %143 = memref.load %arg1[%c2_58, %c2_59] : memref<3x3xf32, #tpu.memory_space<smem>>
    %144 = vector.broadcast %143 : f32 to vector<8x128xf32>
    %145 = arith.mulf %144, %30 : vector<8x128xf32>
    %146 = arith.addf %142, %145 : vector<8x128xf32>
    %147 = math.exp %146 : vector<8x128xf32>
    %c2_60 = arith.constant 2 : index
    %148 = memref.load %arg2[%c2_60] : memref<3xf32, #tpu.memory_space<smem>>
    %c2_61 = arith.constant 2 : index
    %c0_62 = arith.constant 0 : index
    %149 = memref.load %arg1[%c2_61, %c0_62] : memref<3x3xf32, #tpu.memory_space<smem>>
    %150 = arith.mulf %148, %149 : f32
    %151 = vector.broadcast %150 : f32 to vector<8x128xf32>
    %152 = arith.mulf %151, %147 : vector<8x128xf32>
    %153 = arith.mulf %152, %23 : vector<8x128xf32>
    %c2_63 = arith.constant 2 : index
    %154 = memref.load %arg2[%c2_63] : memref<3xf32, #tpu.memory_space<smem>>
    %c2_64 = arith.constant 2 : index
    %c1_65 = arith.constant 1 : index
    %155 = memref.load %arg1[%c2_64, %c1_65] : memref<3x3xf32, #tpu.memory_space<smem>>
    %156 = arith.mulf %154, %155 : f32
    %157 = vector.broadcast %156 : f32 to vector<8x128xf32>
    %158 = arith.mulf %157, %147 : vector<8x128xf32>
    %159 = arith.mulf %158, %25 : vector<8x128xf32>
    %c2_66 = arith.constant 2 : index
    %160 = memref.load %arg2[%c2_66] : memref<3xf32, #tpu.memory_space<smem>>
    %c2_67 = arith.constant 2 : index
    %c2_68 = arith.constant 2 : index
    %161 = memref.load %arg1[%c2_67, %c2_68] : memref<3x3xf32, #tpu.memory_space<smem>>
    %162 = arith.mulf %160, %161 : f32
    %163 = vector.broadcast %162 : f32 to vector<8x128xf32>
    %164 = arith.mulf %163, %147 : vector<8x128xf32>
    %165 = arith.mulf %164, %27 : vector<8x128xf32>
    %cst_69 = arith.constant 2.000000e+00 : f32
    %166 = vector.broadcast %cst_69 : f32 to vector<8x128xf32>
    %167 = arith.mulf %166, %153 : vector<8x128xf32>
    %168 = arith.mulf %34, %159 : vector<8x128xf32>
    %169 = arith.addf %167, %168 : vector<8x128xf32>
    %170 = arith.mulf %40, %165 : vector<8x128xf32>
    %171 = arith.addf %169, %170 : vector<8x128xf32>
    %cst_70 = arith.constant 2.000000e+00 : f32
    %172 = vector.broadcast %cst_70 : f32 to vector<8x128xf32>
    %173 = arith.mulf %172, %153 : vector<8x128xf32>
    %174 = arith.mulf %38, %159 : vector<8x128xf32>
    %175 = arith.addf %173, %174 : vector<8x128xf32>
    %176 = arith.mulf %42, %165 : vector<8x128xf32>
    %177 = arith.addf %175, %176 : vector<8x128xf32>
    %178 = arith.addf %159, %165 : vector<8x128xf32>
    %179 = arith.mulf %44, %178 : vector<8x128xf32>
    %180 = arith.addf %133, %171 : vector<8x128xf32>
    %181 = arith.addf %134, %177 : vector<8x128xf32>
    %182 = arith.addf %135, %179 : vector<8x128xf32>
    %cst_71 = arith.constant 5.000000e-01 : f32
    %183 = vector.broadcast %cst_71 : f32 to vector<8x128xf32>
    %184 = arith.mulf %183, %180 : vector<8x128xf32>
    %c0_72 = arith.constant 0 : index
    %185 = memref.load %arg3[%c0_72] : memref<3xf32, #tpu.memory_space<smem>>
    %186 = vector.broadcast %185 : f32 to vector<8x128xf32>
    %187 = arith.subf %184, %186 : vector<8x128xf32>
    %c0_73 = arith.constant 0 : index
    %c0_74 = arith.constant 0 : index
    %c0_75 = arith.constant 0 : index
    %188 = vector.load %arg5[%c0_73, %c0_74, %c0_75] : memref<3x8x128xf32, #tpu.memory_space<vmem>>, vector<1x8x128xf32>
    %189 = vector.shape_cast %188 : vector<1x8x128xf32> to vector<8x128xf32>
    %190 = vector.shape_cast %187 : vector<8x128xf32> to vector<1x8x128xf32>
    tpu.vector_store %arg5[%c0_73, %c0_74, %c0_75], %190 {strides = array<i32>} : memref<3x8x128xf32, #tpu.memory_space<vmem>>, vector<1x8x128xf32>,
    %cst_76 = arith.constant 5.000000e-01 : f32
    %191 = vector.broadcast %cst_76 : f32 to vector<8x128xf32>
    %192 = arith.mulf %191, %181 : vector<8x128xf32>
    %c1_77 = arith.constant 1 : index
    %193 = memref.load %arg3[%c1_77] : memref<3xf32, #tpu.memory_space<smem>>
    %194 = vector.broadcast %193 : f32 to vector<8x128xf32>
    %195 = arith.subf %192, %194 : vector<8x128xf32>
    %c1_78 = arith.constant 1 : index
    %c0_79 = arith.constant 0 : index
    %c0_80 = arith.constant 0 : index
    %196 = vector.load %arg5[%c1_78, %c0_79, %c0_80] : memref<3x8x128xf32, #tpu.memory_space<vmem>>, vector<1x8x128xf32>
    %197 = vector.shape_cast %196 : vector<1x8x128xf32> to vector<8x128xf32>
    %198 = vector.shape_cast %195 : vector<8x128xf32> to vector<1x8x128xf32>
    tpu.vector_store %arg5[%c1_78, %c0_79, %c0_80], %198 {strides = array<i32>} : memref<3x8x128xf32, #tpu.memory_space<vmem>>, vector<1x8x128xf32>,
    %cst_81 = arith.constant 5.000000e-01 : f32
    %199 = vector.broadcast %cst_81 : f32 to vector<8x128xf32>
    %200 = arith.mulf %199, %182 : vector<8x128xf32>
    %c2_82 = arith.constant 2 : index
    %201 = memref.load %arg3[%c2_82] : memref<3xf32, #tpu.memory_space<smem>>
    %202 = vector.broadcast %201 : f32 to vector<8x128xf32>
    %203 = arith.subf %200, %202 : vector<8x128xf32>
    %c2_83 = arith.constant 2 : index
    %c0_84 = arith.constant 0 : index
    %c0_85 = arith.constant 0 : index
    %204 = vector.load %arg5[%c2_83, %c0_84, %c0_85] : memref<3x8x128xf32, #tpu.memory_space<vmem>>, vector<1x8x128xf32>
    %205 = vector.shape_cast %204 : vector<1x8x128xf32> to vector<8x128xf32>
    %206 = vector.shape_cast %203 : vector<8x128xf32> to vector<1x8x128xf32>
    tpu.vector_store %arg5[%c2_83, %c0_84, %c0_85], %206 {strides = array<i32>} : memref<3x8x128xf32, #tpu.memory_space<vmem>>, vector<1x8x128xf32>,
    return
  }
  func.func @transform_0(%arg0: i32) -> (i32, i32) {
    %c0_i32 = arith.constant 0 : i32
    %c0_i32_0 = arith.constant 0 : i32
    %c0_i32_1 = arith.constant 0 : i32
    return %c0_i32, %c0_i32_0 : i32, i32
  }
  func.func @transform_1(%arg0: i32) -> i32 {
    %c0_i32 = arith.constant 0 : i32
    %c0_i32_0 = arith.constant 0 : i32
    return %c0_i32 : i32
  }
  func.func @transform_2(%arg0: i32) -> i32 {
    %c0_i32 = arith.constant 0 : i32
    %c0_i32_0 = arith.constant 0 : i32
    return %c0_i32 : i32
  }
  func.func @transform_3(%arg0: i32) -> (i32, i32, i32) {
    %c0_i32 = arith.constant 0 : i32
    %c0_i32_0 = arith.constant 0 : i32
    %c0_i32_1 = arith.constant 0 : i32
    return %c0_i32, %arg0, %c0_i32_0 : i32, i32, i32
  }
  func.func @transform_4(%arg0: i32) -> (i32, i32, i32) {
    %c0_i32 = arith.constant 0 : i32
    %c0_i32_0 = arith.constant 0 : i32
    %c0_i32_1 = arith.constant 0 : i32
    return %c0_i32, %arg0, %c0_i32_0 : i32, i32, i32
  }
}

</mosaic_0001>

<llo_original>
// kernel: tpu_custom_call.1
$region0: #{tpu_custom_call.1}
  #allocation0 [shape = 'u32[]', space=smem, size = 0x4, offset = 0x4, fixed_abs, tag = 'smem constant byte address 0x4 - core index']
  #allocation1 [shape = 'u32[72,128]{1,0:T(1,128)}', space=vmem, size = 0x9000, scoped, tag = 'internal scratch']
  %s0 = inlined_call_operand.hbm [shape: f32[3,3], index: 0, kind: input, shape index: {}]
  %s1 = inlined_call_operand.hbm [shape: f32[3], index: 1, kind: input, shape index: {}]
  %s2 = inlined_call_operand.vmem [shape: f32[3], index: 2, kind: input, shape index: {}]
  %s3 = inlined_call_operand.hbm [shape: f32[3,8,128], index: 3, kind: input, shape index: {}]
  %s4 = inlined_call_operand.hbm [shape: f32[3,8,128], index: 4, kind: output, shape index: {}]
  %s5 = sld [smem:[#allocation0]]
  $region42: #{tpu_custom_call.1} parent=0
    _
  %s7 = ssub.s32 1, %s5
  %s8 = scalar_select 0, %s7, %s5
  $region1: #{tpu_custom_call.1} parent=0
    #allocation2 [shape = 'u8[2048]{0}', space=smem, size = 0x800, scoped, tag = 'input window, operand 0, single buffered']
    #allocation3 [shape = 's32[1]{0}', space=sflag, size = 0x4, scoped, tag = 'scoped memory for tpu_custom_call.1']
    #allocation4 [shape = 's32[1]{0}', space=sflag, size = 0x4, scoped, tag = 'scoped memory for tpu_custom_call.1']
    #allocation5 [shape = 's32[1]{0}', space=sflag, size = 0x4, scoped, tag = 'scoped memory for tpu_custom_call.1']
    #allocation6 [shape = 's32[1]{0}', space=sflag, size = 0x4, scoped, tag = 'scoped memory for tpu_custom_call.1']
    #allocation7 [shape = 'u8[512]{0}', space=smem, size = 0x200, scoped, tag = 'input window, operand 1, single buffered']
    #allocation8 [shape = 's32[1]{0}', space=sflag, size = 0x4, scoped, tag = 'scoped memory for tpu_custom_call.1']
    #allocation9 [shape = 'u8[512]{0}', space=smem, size = 0x200, scoped, tag = 'input window, operand 2, single buffered']
    #allocation10 [shape = 'u8[12288]{0}', space=vmem, size = 0x3000, scoped, tag = 'input window, operand 3, single buffered']
    #allocation11 [shape = 'u8[12288]{0}', space=vmem, size = 0x3000, scoped, tag = 'output window, operand 0, single buffered']
    %9 = vsyncpa [#allocation5], 0
    %10 = vsyncpa [#allocation8], 0
    %11 = vsyncpa [#allocation6], 0
    %12 = vsyncpa [#allocation3], 0
    %13 = vsyncpa [#allocation4], 0
    // Predicated region
    $region2: #{tpu_custom_call.1} parent=1 // pred_check
      _
    $region3: #{tpu_custom_call.1} parent=1 // pred_check_branch
      %15 = sbr.rel (0) target = $region5
    $region4: #{tpu_custom_call.1} parent=1 // pred_region
      %17 = vsyncadd [#allocation5], 0
      %s19 = sshll.u32 %s0, 4
      %s20 = int_to_ptr.hbm [resolvable:$true] %s19
      %22 = dma.hbm_to_smem %s20, 64, [#allocation2], [#allocation5]
    $region5: #{tpu_custom_call.1} parent=1 // pred_fallthru
      _
    // Predicated region
    $region6: #{tpu_custom_call.1} parent=1 // pred_check
      _
    $region7: #{tpu_custom_call.1} parent=1 // pred_check_branch
      %24 = sbr.rel (0) target = $region9
    $region8: #{tpu_custom_call.1} parent=1 // pred_region
      %26 = vsyncadd [#allocation8], 0
      %s28 = sshll.u32 %s1, 4
      %s29 = int_to_ptr.hbm [resolvable:$true] %s28
      %31 = dma.hbm_to_smem %s29, 16, [#allocation7], [#allocation8]
    $region9: #{tpu_custom_call.1} parent=1 // pred_fallthru
      _
    // Predicated region
    $region10: #{tpu_custom_call.1} parent=1 // pred_check
      _
    $region11: #{tpu_custom_call.1} parent=1 // pred_check_branch
      %33 = sbr.rel (0) target = $region13
    $region12: #{tpu_custom_call.1} parent=1 // pred_region
      %35 = vsyncadd [#allocation6], 0
      %s37 = sshll.u32 %s2, 4
      %s38 = int_to_ptr.vmem [resolvable:$true] %s37
      %40 = dma.vmem_to_smem %s38, 16, [#allocation9], [#allocation6]
    $region13: #{tpu_custom_call.1} parent=1 // pred_fallthru
      _
    // Predicated region
    $region14: #{tpu_custom_call.1} parent=1 // pred_check
      _
    $region15: #{tpu_custom_call.1} parent=1 // pred_check_branch
      %42 = sbr.rel (0) target = $region17
    $region16: #{tpu_custom_call.1} parent=1 // pred_region
      %44 = vsyncadd [#allocation3], 0
      %s45 = sshll.u32 %s3, 4
      %s46 = int_to_ptr.hbm [resolvable:$true] %s45
      %s47 = sshll.u32 [#allocation10], 4
      %s48 = int_to_ptr.vmem [resolvable:$true] %s47
      %53 = dma.hbm_to_vmem [thread:$0]  %s46, 384, %s48, [#allocation3], 128, 128, 8
    $region17: #{tpu_custom_call.1} parent=1 // pred_fallthru
      _
    // Predicated region
    $region18: #{tpu_custom_call.1} parent=1 // pred_check
      _
    $region19: #{tpu_custom_call.1} parent=1 // pred_check_branch
      %55 = sbr.rel (0) target = $region21
    $region20: #{tpu_custom_call.1} parent=1 // pred_region
      %57 = dma.done [#allocation5], 64
    $region21: #{tpu_custom_call.1} parent=1 // pred_fallthru
      _
    // Predicated region
    $region22: #{tpu_custom_call.1} parent=1 // pred_check
      _
    $region23: #{tpu_custom_call.1} parent=1 // pred_check_branch
      %59 = sbr.rel (0) target = $region25
    $region24: #{tpu_custom_call.1} parent=1 // pred_region
      %61 = dma.done [#allocation8], 16
    $region25: #{tpu_custom_call.1} parent=1 // pred_fallthru
      _
    // Predicated region
    $region26: #{tpu_custom_call.1} parent=1 // pred_check
      _
    $region27: #{tpu_custom_call.1} parent=1 // pred_check_branch
      %63 = sbr.rel (0) target = $region29
    $region28: #{tpu_custom_call.1} parent=1 // pred_region
      %65 = dma.done [#allocation6], 16
    $region29: #{tpu_custom_call.1} parent=1 // pred_fallthru
      _
    // Predicated region
    $region30: #{tpu_custom_call.1} parent=1 // pred_check
      _
    $region31: #{tpu_custom_call.1} parent=1 // pred_check_branch
      %67 = sbr.rel (0) target = $region33
    $region32: #{tpu_custom_call.1} parent=1 // pred_region
      %69 = dma.done [#allocation3], 384
    $region33: #{tpu_custom_call.1} parent=1 // pred_fallthru
      _
    %70 = sfence
    %v71 = vld [vmem:[#allocation10] sm:$0xff]
    %s72 = scalar_lea.vmem [#allocation10], 8
    %v73 = vld [vmem:[%s72] sm:$0xff]
    %s74 = scalar_lea.vmem [#allocation10], 16
    %v75 = vld [vmem:[%s74] sm:$0xff]
    %v76 = vmul.f32 %v71, 2.0
    %v77 = vadd.f32 %v76, 1.0
    %v78 = vmul.f32 %v73, 2.0
    %v79 = vadd.f32 %v78, 1.0
    %v80 = vadd.f32 %v77, %v79
    %v81 = vadd.f32 %v80, 1.0
    %v82 = vmul.f32 %v77, %v79
    %v83 = vmul.f32 %v75, %v75
    %v84 = vsub.f32 %v82, %v83
    %v85 = vadd.f32 %v84, %v77
    %v86 = vadd.f32 %v85, %v79
    %v87 = vrcp.pop %v81
    %v88 = vmul.f32 %v81, %v87
    %v89 = vsub.f32 1.0, %v88
    %v90 = vmul.f32 %v87, %v89
    %v91 = vadd.f32 %v87, %v90
    %vm92 = vweird.f32 %v81
    %vm93 = vweird.f32 %v87
    %vm94 = vmor %vm92, %vm93
    %v95 = vsel %vm94, %v87, %v91
    %v96 = vand.u32 2147483647, %v81
    %vm97 = vcmp.eq.f32.partialorder %v96, 8.507059e+37
    %v98 = vand.u32 %v81, 2147483648
    %v99 = vor.u32 1.1754944e-38, %v98
    %v100 = vsel %vm97, %v99, %v95
    %v101 = vmul.f32 1.0, %v100
    %v102 = vrcp.pop %v86
    %v103 = vmul.f32 %v86, %v102
    %v104 = vsub.f32 1.0, %v103
    %v105 = vmul.f32 %v102, %v104
    %v106 = vadd.f32 %v102, %v105
    %vm107 = vweird.f32 %v86
    %vm108 = vweird.f32 %v102
    %vm109 = vmor %vm107, %vm108
    %v110 = vsel %vm109, %v102, %v106
    %v111 = vand.u32 2147483647, %v86
    %vm112 = vcmp.eq.f32.partialorder %v111, 8.507059e+37
    %v113 = vand.u32 %v86, 2147483648
    %v114 = vor.u32 1.1754944e-38, %v113
    %v115 = vsel %vm112, %v114, %v110
    %v116 = vmul.f32 1.0, %v115
    %v117 = vrcp.pop %v84
    %v118 = vmul.f32 %v84, %v117
    %v119 = vsub.f32 1.0, %v118
    %v120 = vmul.f32 %v117, %v119
    %v121 = vadd.f32 %v117, %v120
    %vm122 = vweird.f32 %v84
    %vm123 = vweird.f32 %v117
    %vm124 = vmor %vm122, %vm123
    %v125 = vsel %vm124, %v117, %v121
    %v126 = vand.u32 2147483647, %v84
    %vm127 = vcmp.eq.f32.partialorder %v126, 8.507059e+37
    %v128 = vand.u32 %v84, 2147483648
    %v129 = vor.u32 1.1754944e-38, %v128
    %v130 = vsel %vm127, %v129, %v125
    %v131 = vmul.f32 1.0, %v130
    %v132 = vlog2.pop %v81
    %v133 = vmul.f32 %v132, 0.6931472
    %v134 = vlog2.pop %v86
    %v135 = vmul.f32 %v134, 0.6931472
    %v136 = vlog2.pop %v84
    %v137 = vmul.f32 %v136, 0.6931472
    %v138 = vadd.f32 %v79, 1.0
    %v139 = vmul.f32 %v138, 2.0
    %v140 = vadd.f32 %v77, 1.0
    %v141 = vmul.f32 %v140, 2.0
    %v142 = vmul.f32 %v79, 2.0
    %v143 = vmul.f32 %v77, 2.0
    %v144 = vmul.f32 %v75, -2.0
    %s145 = sld [smem:[#allocation2]]
    %v146 = vstv %s145
    %v147 = vmul.f32 %v146, %v133
    %s148 = sld [smem:[#allocation2 + $0x1]]
    %v149 = vstv %s148
    %v150 = vmul.f32 %v149, %v135
    %v151 = vadd.f32 %v147, %v150
    %s152 = sld [smem:[#allocation2 + $0x2]]
    %v153 = vstv %s152
    %v154 = vmul.f32 %v153, %v137
    %v155 = vadd.f32 %v151, %v154
    %v156 = vmul.f32 %v155, 1.442695
    %v157 = vpow.pop %v156
    %s158 = sld [smem:[#allocation7]]
    %s159 = smul.f32 %s158, %s145
    %v160 = vstv %s159
    %v161 = vmul.f32 %v160, %v157
    %v162 = vmul.f32 %v161, %v101
    %s163 = smul.f32 %s158, %s148
    %v164 = vstv %s163
    %v165 = vmul.f32 %v164, %v157
    %v166 = vmul.f32 %v165, %v116
    %s167 = smul.f32 %s158, %s152
    %v168 = vstv %s167
    %v169 = vmul.f32 %v168, %v157
    %v170 = vmul.f32 %v169, %v131
    %v171 = vmul.f32 %v162, 2.0
    %v172 = vmul.f32 %v139, %v166
    %v173 = vadd.f32 %v171, %v172
    %v174 = vmul.f32 %v142, %v170
    %v175 = vadd.f32 %v173, %v174
    %v176 = vmul.f32 %v141, %v166
    %v177 = vadd.f32 %v171, %v176
    %v178 = vmul.f32 %v143, %v170
    %v179 = vadd.f32 %v177, %v178
    %v180 = vadd.f32 %v166, %v170
    %v181 = vmul.f32 %v144, %v180
    %s182 = sld [smem:[#allocation2 + $0x80]]
    %v183 = vstv %s182
    %v184 = vmul.f32 %v183, %v133
    %s185 = sld [smem:[#allocation2 + $0x81]]
    %v186 = vstv %s185
    %v187 = vmul.f32 %v186, %v135
    %v188 = vadd.f32 %v184, %v187
    %s189 = sld [smem:[#allocation2 + $0x82]]
    %v190 = vstv %s189
    %v191 = vmul.f32 %v190, %v137
    %v192 = vadd.f32 %v188, %v191
    %v193 = vmul.f32 %v192, 1.442695
    %v194 = vpow.pop %v193
    %s195 = sld [smem:[#allocation7 + $0x1]]
    %s196 = smul.f32 %s195, %s182
    %v197 = vstv %s196
    %v198 = vmul.f32 %v197, %v194
    %v199 = vmul.f32 %v198, %v101
    %s200 = smul.f32 %s195, %s185
    %v201 = vstv %s200
    %v202 = vmul.f32 %v201, %v194
    %v203 = vmul.f32 %v202, %v116
    %s204 = smul.f32 %s195, %s189
    %v205 = vstv %s204
    %v206 = vmul.f32 %v205, %v194
    %v207 = vmul.f32 %v206, %v131
    %v208 = vmul.f32 %v199, 2.0
    %v209 = vmul.f32 %v139, %v203
    %v210 = vadd.f32 %v208, %v209
    %v211 = vmul.f32 %v142, %v207
    %v212 = vadd.f32 %v210, %v211
    %v213 = vmul.f32 %v141, %v203
    %v214 = vadd.f32 %v208, %v213
    %v215 = vmul.f32 %v143, %v207
    %v216 = vadd.f32 %v214, %v215
    %v217 = vadd.f32 %v203, %v207
    %v218 = vmul.f32 %v144, %v217
    %v219 = vadd.f32 %v175, %v212
    %v220 = vadd.f32 %v179, %v216
    %v221 = vadd.f32 %v181, %v218
    %s222 = sld [smem:[#allocation2 + $0x100]]
    %v223 = vstv %s222
    %v224 = vmul.f32 %v223, %v133
    %s225 = sld [smem:[#allocation2 + $0x101]]
    %v226 = vstv %s225
    %v227 = vmul.f32 %v226, %v135
    %v228 = vadd.f32 %v224, %v227
    %s229 = sld [smem:[#allocation2 + $0x102]]
    %v230 = vstv %s229
    %v231 = vmul.f32 %v230, %v137
    %v232 = vadd.f32 %v228, %v231
    %v233 = vmul.f32 %v232, 1.442695
    %v234 = vpow.pop %v233
    %s235 = sld [smem:[#allocation7 + $0x2]]
    %s236 = smul.f32 %s235, %s222
    %v237 = vstv %s236
    %v238 = vmul.f32 %v237, %v234
    %v239 = vmul.f32 %v238, %v101
    %s240 = smul.f32 %s235, %s225
    %v241 = vstv %s240
    %v242 = vmul.f32 %v241, %v234
    %v243 = vmul.f32 %v242, %v116
    %s244 = smul.f32 %s235, %s229
    %v245 = vstv %s244
    %v246 = vmul.f32 %v245, %v234
    %v247 = vmul.f32 %v246, %v131
    %v248 = vmul.f32 %v239, 2.0
    %v249 = vmul.f32 %v139, %v243
    %v250 = vadd.f32 %v248, %v249
    %v251 = vmul.f32 %v142, %v247
    %v252 = vadd.f32 %v250, %v251
    %v253 = vmul.f32 %v141, %v243
    %v254 = vadd.f32 %v248, %v253
    %v255 = vmul.f32 %v143, %v247
    %v256 = vadd.f32 %v254, %v255
    %v257 = vadd.f32 %v243, %v247
    %v258 = vmul.f32 %v144, %v257
    %v259 = vadd.f32 %v219, %v252
    %v260 = vadd.f32 %v220, %v256
    %v261 = vadd.f32 %v221, %v258
    %v262 = vmul.f32 %v259, 0.5
    %s263 = sld [smem:[#allocation9]]
    %v264 = vstv %s263
    %v265 = vsub.f32 %v262, %v264
    %266 = vst [vmem:[#allocation11] sm:$0xff] %v265
    %v267 = vmul.f32 %v260, 0.5
    %s268 = sld [smem:[#allocation9 + $0x1]]
    %v269 = vstv %s268
    %v270 = vsub.f32 %v267, %v269
    %s271 = scalar_lea.vmem [#allocation11], 8
    %272 = vst [vmem:[%s271] sm:$0xff] %v270
    %v273 = vmul.f32 %v261, 0.5
    %s274 = sld [smem:[#allocation9 + $0x2]]
    %v275 = vstv %s274
    %v276 = vsub.f32 %v273, %v275
    %s277 = scalar_lea.vmem [#allocation11], 16
    %278 = vst [vmem:[%s277] sm:$0xff] %v276
    // Predicated region
    $region34: #{tpu_custom_call.1} parent=1 // pred_check
      _
    $region35: #{tpu_custom_call.1} parent=1 // pred_check_branch
      %280 = sbr.rel (0) target = $region37
    $region36: #{tpu_custom_call.1} parent=1 // pred_region
      %282 = vsyncadd [#allocation4], 0
      %s283 = sshll.u32 [#allocation11], 4
      %s284 = int_to_ptr.vmem [resolvable:$true] %s283
      %s285 = sshll.u32 %s4, 4
      %s286 = int_to_ptr.hbm [resolvable:$true] %s285
      %291 = dma.vmem_to_hbm [thread:$0]  %s284, 384, %s286, [#allocation4], 128, 128, 8
    $region37: #{tpu_custom_call.1} parent=1 // pred_fallthru
      _
    // Predicated region
    $region38: #{tpu_custom_call.1} parent=1 // pred_check
      _
    $region39: #{tpu_custom_call.1} parent=1 // pred_check_branch
      %293 = sbr.rel (0) target = $region41
    $region40: #{tpu_custom_call.1} parent=1 // pred_region
      %295 = dma.done [#allocation4], 384
    $region41: #{tpu_custom_call.1} parent=1 // pred_fallthru
      _
    %296 = vsyncpa [#allocation3], 1
    %297 = vsyncpa [#allocation4], 1
    %298 = vsyncpa [#allocation5], 1
    %299 = vsyncpa [#allocation8], 1
    %300 = vsyncpa [#allocation6], 1

</llo_original>
